<compile_context>
chip_gen: v6e
topology: v6e:2x2x1
jax: 0.10.0
libtpu: 0.0.40
codegen_flags: <defaults>
</compile_context>

<pallas_src>
import jax
import jax.numpy as jnp
from jax.experimental import pallas as pl
from jax.experimental.pallas import tpu as pltpu


TILE_N_DEFAULT = 16384  # lane-dense; bf16 double-buffered x/out + f32 scratch stays well under scoped VMEM


def _round_up(n, m):
    return ((n + m - 1) // m) * m


def sigmoid_layer_kernel(x_ref, au_ref, w_ref, b_ref, o_ref):
    # x tile: (in_dim, TILE_N) in compute dtype; au/w/b are tiny VMEM-resident
    # pre-normalized parameters (au = exp(log_a) * softmax(u), w = softmax(w)).
    x = x_ref[...]
    inner = jnp.dot(au_ref[...], x, preferred_element_type=jnp.float32) + b_ref[...]
    # Cast sigmoid output back to the MXU-native compute dtype for the second
    # dot; accumulation stays f32 via preferred_element_type.
    out = jax.nn.sigmoid(inner).astype(w_ref.dtype)
    o_ref[...] = jnp.dot(
        w_ref[...], out, preferred_element_type=jnp.float32
    ).astype(o_ref.dtype)


def sigmoid_layer(x, unnormalized_w, log_a, b, unnormalized_u, *,
                  tile_n=TILE_N_DEFAULT, compute_dtype=jnp.bfloat16):
    in_dim, n = x.shape
    out_dim = unnormalized_w.shape[0]

    # ---- Hoisted parameter preprocessing (tiny; removes per-step EUP/XLU work).
    a = jnp.exp(log_a.astype(jnp.float32))                       # (out_dim, 1)
    u = jax.nn.softmax(unnormalized_u.astype(jnp.float32), axis=1)
    w = jax.nn.softmax(unnormalized_w.astype(jnp.float32), axis=1)
    au = (a * u).astype(compute_dtype)                           # (out_dim, in_dim)
    w = w.astype(compute_dtype)                                  # (out_dim, out_dim)
    b = b.astype(jnp.float32)                                    # (out_dim, 1)
    x = x.astype(compute_dtype)                                  # (in_dim, N)

    # ---- Tile: lane-dense multiple of 128, no bigger than the (rounded) problem,
    # and split into >= 2 grid steps when N allows so both v7x TCs get work
    # (harmless extra ~0.35 us on the 1-TC v5e/v6e).
    tn = max(128, min(tile_n, _round_up(pl.cdiv(n, 2), 128)))
    grid = (pl.cdiv(n, tn),)

    # ---- Explicit VMEM budget: double-buffered x/out tiles + f32 intermediates.
    cbytes = jnp.dtype(compute_dtype).itemsize
    tile_bytes = 2 * (in_dim + out_dim) * tn * cbytes            # x/out, double-buffered
    tile_bytes += 2 * out_dim * tn * 4                           # f32 inner + sigmoid intermediates
    param_bytes = (out_dim * in_dim + out_dim * out_dim) * cbytes + 2 * out_dim * 4
    vmem_budget = int(min(max(32 << 20, 2 * (tile_bytes + param_bytes)), 64 << 20))

    # ---- Advisory cost estimate so XLA overlaps neighbors with this mem-bound call.
    cost = pl.CostEstimate(
        flops=2 * n * out_dim * (in_dim + out_dim),
        transcendentals=n * out_dim,
        bytes_accessed=(in_dim + out_dim) * n * cbytes + param_bytes,
    )

    return pl.pallas_call(
        sigmoid_layer_kernel,
        out_shape=jax.ShapeDtypeStruct((out_dim, n), compute_dtype),
        grid=grid,
        in_specs=[
            pl.BlockSpec((in_dim, tn), lambda j: (0, j)),    # x, streamed along N
            pl.BlockSpec((out_dim, in_dim), lambda j: (0, 0)),   # au, VMEM-resident
            pl.BlockSpec((out_dim, out_dim), lambda j: (0, 0)),  # w,  VMEM-resident
            pl.BlockSpec((out_dim, 1), lambda j: (0, 0)),        # b,  VMEM-resident
        ],
        out_specs=pl.BlockSpec((out_dim, tn), lambda j: (0, j)),
        compiler_params=pltpu.CompilerParams(
            dimension_semantics=("parallel",),
            vmem_limit_bytes=vmem_budget,
        ),
        cost_estimate=cost,
    )(x, au, w, b)


def _reference(x, unnormalized_w, log_a, b, unnormalized_u):
    a = jnp.exp(log_a)
    u = jax.nn.softmax(unnormalized_u, axis=1)
    w = jax.nn.softmax(unnormalized_w, axis=1)
    inner = (a * u) @ x + b
    return w @ jax.nn.sigmoid(inner)


if __name__ == "__main__":
    in_dim, out_dim, n = 32, 16, 512
    key = jax.random.PRNGKey(0)
    k1, k2, k3, k4, k5 = jax.random.split(key, 5)

    # Deterministic synthetic parameters (torch.randn equivalents by shape).
    unnormalized_w = jax.random.normal(k1, (out_dim, out_dim), jnp.float32)
    log_a = jax.random.normal(k2, (out_dim, 1), jnp.float32)
    b = jax.random.normal(k3, (out_dim, 1), jnp.float32)
    unnormalized_u = jax.random.normal(k4, (out_dim, in_dim), jnp.float32)
    x = jax.random.normal(k5, (in_dim, n), jnp.float32)

    y_ref = _reference(x, unnormalized_w, log_a, b, unnormalized_u)

    # f32 compute path: bit-for-bit-ish match with the reference.
    y_f32 = sigmoid_layer(x, unnormalized_w, log_a, b, unnormalized_u,
                          compute_dtype=jnp.float32)
    y_f32 = jax.block_until_ready(y_f32)
    assert y_f32.shape == (out_dim, n)
    assert jnp.allclose(y_f32, y_ref, atol=1e-5, rtol=1e-5), "f32 mismatch vs reference"

    # Default fast path: bf16 streaming + bf16 MXU operands, f32 accumulation.
    y_bf16 = sigmoid_layer(x, unnormalized_w, log_a, b, unnormalized_u)
    y_bf16 = jax.block_until_ready(y_bf16)
    assert y_bf16.shape == (out_dim, n)
    assert y_bf16.dtype == jnp.bfloat16
    assert jnp.allclose(y_bf16.astype(jnp.float32), y_ref, atol=5e-2, rtol=5e-2), \
        "bf16 mismatch vs reference"

    print("KERNEL_OK")
</pallas_src>

<mosaic_0001>
module attributes {stable_mosaic.version = 11 : i64} {
  func.func @sigmoid_layer_kernel(%arg0: i32, %arg1: memref<32x256xf32, #tpu.memory_space<vmem>>, %arg2: memref<16x32xf32, #tpu.memory_space<vmem>>, %arg3: memref<16x16xf32, #tpu.memory_space<vmem>>, %arg4: memref<16x1xf32, #tpu.memory_space<vmem>>, %arg5: memref<16x256xf32, #tpu.memory_space<vmem>>) attributes {dimension_semantics = [#tpu.dimension_semantics<parallel>], iteration_bounds = array<i64: 2>, scalar_prefetch = 0 : i64, scratch_operands = 0 : i64, tpu.core_type = #tpu.core_type<tc>, window_params = [{transform_indices = @transform_0, window_bounds = array<i64: 32, 256>}, {pipeline_mode = #tpu.pipeline_mode<synchronous>, transform_indices = @transform_1, window_bounds = array<i64: 16, 32>}, {pipeline_mode = #tpu.pipeline_mode<synchronous>, transform_indices = @transform_2, window_bounds = array<i64: 16, 16>}, {pipeline_mode = #tpu.pipeline_mode<synchronous>, transform_indices = @transform_3, window_bounds = array<i64: 16, 1>}, {transform_indices = @transform_4, window_bounds = array<i64: 16, 256>}]} {
    %c0 = arith.constant 0 : index
    %c0_0 = arith.constant 0 : index
    %0 = vector.load %arg1[%c0, %c0_0] : memref<32x256xf32, #tpu.memory_space<vmem>>, vector<32x256xf32>
    %c0_1 = arith.constant 0 : index
    %c0_2 = arith.constant 0 : index
    %1 = vector.load %arg2[%c0_1, %c0_2] : memref<16x32xf32, #tpu.memory_space<vmem>>, vector<16x32xf32>
    %cst = arith.constant dense<0.000000e+00> : vector<16x256xf32>
    %2 = tpu.matmul %1, %0, %cst {dimension_numbers = #tpu.dot_dimension_numbers<[1], [0], [0], [1], [0, 0, 1, 1], [], []>} : vector<16x32xf32>, vector<32x256xf32>, vector<16x256xf32> -> vector<16x256xf32>
    %c0_3 = arith.constant 0 : index
    %c0_4 = arith.constant 0 : index
    %3 = vector.load %arg4[%c0_3, %c0_4] : memref<16x1xf32, #tpu.memory_space<vmem>>, vector<16x1xf32>
    %4 = vector.broadcast %3 : vector<16x1xf32> to vector<16x256xf32>
    %5 = arith.addf %2, %4 : vector<16x256xf32>
    %6 = arith.negf %5 : vector<16x256xf32>
    %7 = math.exp %6 : vector<16x256xf32>
    %cst_5 = arith.constant 1.000000e+00 : f32
    %8 = vector.broadcast %cst_5 : f32 to vector<16x256xf32>
    %9 = arith.addf %8, %7 : vector<16x256xf32>
    %10 = arith.divf %8, %9 : vector<16x256xf32>
    %c0_6 = arith.constant 0 : index
    %c0_7 = arith.constant 0 : index
    %11 = vector.load %arg3[%c0_6, %c0_7] : memref<16x16xf32, #tpu.memory_space<vmem>>, vector<16x16xf32>
    %cst_8 = arith.constant dense<0.000000e+00> : vector<16x256xf32>
    %12 = tpu.matmul %11, %10, %cst_8 {dimension_numbers = #tpu.dot_dimension_numbers<[1], [0], [0], [1], [0, 0, 1, 1], [], []>} : vector<16x16xf32>, vector<16x256xf32>, vector<16x256xf32> -> vector<16x256xf32>
    %c0_9 = arith.constant 0 : index
    %c0_10 = arith.constant 0 : index
    %13 = vector.load %arg5[%c0_9, %c0_10] : memref<16x256xf32, #tpu.memory_space<vmem>>, vector<16x256xf32>
    tpu.vector_store %arg5[%c0_9, %c0_10], %12 {strides = array<i32>} : memref<16x256xf32, #tpu.memory_space<vmem>>, vector<16x256xf32>,
    return
  }
  func.func @transform_0(%arg0: i32) -> (i32, i32) {
    %c0_i32 = arith.constant 0 : i32
    %c0_i32_0 = arith.constant 0 : i32
    return %c0_i32, %arg0 : i32, i32
  }
  func.func @transform_1(%arg0: i32) -> (i32, i32) {
    %c0_i32 = arith.constant 0 : i32
    %c0_i32_0 = arith.constant 0 : i32
    %c0_i32_1 = arith.constant 0 : i32
    return %c0_i32, %c0_i32_0 : i32, i32
  }
  func.func @transform_2(%arg0: i32) -> (i32, i32) {
    %c0_i32 = arith.constant 0 : i32
    %c0_i32_0 = arith.constant 0 : i32
    %c0_i32_1 = arith.constant 0 : i32
    return %c0_i32, %c0_i32_0 : i32, i32
  }
  func.func @transform_3(%arg0: i32) -> (i32, i32) {
    %c0_i32 = arith.constant 0 : i32
    %c0_i32_0 = arith.constant 0 : i32
    %c0_i32_1 = arith.constant 0 : i32
    return %c0_i32, %c0_i32_0 : i32, i32
  }
  func.func @transform_4(%arg0: i32) -> (i32, i32) {
    %c0_i32 = arith.constant 0 : i32
    %c0_i32_0 = arith.constant 0 : i32
    return %c0_i32, %arg0 : i32, i32
  }
}

</mosaic_0001>

<llo_original>
// kernel: tpu_custom_call.1
$region0: #{tpu_custom_call.1}
  #allocation0 [shape = 'u32[]', space=smem, size = 0x4, offset = 0x4, fixed_abs, tag = 'smem constant byte address 0x4 - core index']
  #allocation1 [shape = 'u32[144,128]{1,0:T(1,128)}', space=vmem, size = 0x12000, scoped, tag = 'internal scratch']
  %s0 = inlined_call_operand.hbm [shape: f32[32,512], index: 0, kind: input, shape index: {}]
  %s1 = inlined_call_operand.vmem [shape: f32[16,32], index: 1, kind: input, shape index: {}]
  %s2 = inlined_call_operand.hbm [shape: f32[16,16], index: 2, kind: input, shape index: {}]
  %s3 = inlined_call_operand.vmem [shape: f32[16,1], index: 3, kind: input, shape index: {}]
  %s4 = inlined_call_operand.hbm [shape: f32[16,512], index: 4, kind: output, shape index: {}]
  %s5 = sld [smem:[#allocation0]]
  $region57: #{tpu_custom_call.1} parent=0
    _
  %s7 = ssub.s32 1, %s5
  %s8 = scalar_select 0, %s7, %s5
  $region1: #{tpu_custom_call.1} parent=0
    #allocation2 [shape = 'u8[65536]{0}', space=vmem, size = 0x10000, scoped, tag = 'input window, operand 0']
    #allocation3 [shape = 's32[2]{0}', space=sflag, size = 0x8, scoped, tag = 'scoped memory for tpu_custom_call.1']
    #allocation4 [shape = 's32[2]{0}', space=sflag, size = 0x8, scoped, tag = 'scoped memory for tpu_custom_call.1']
    #allocation5 [shape = 'u8[8192]{0}', space=vmem, size = 0x2000, scoped, tag = 'input window, operand 2, single buffered']
    #allocation6 [shape = 's32[1]{0}', space=sflag, size = 0x4, scoped, tag = 'scoped memory for tpu_custom_call.1']
    #allocation7 [shape = 'u8[32768]{0}', space=vmem, size = 0x8000, scoped, tag = 'output window, operand 0']
    %9 = vsyncpa [#allocation3], 0
    %s10 = scalar_lea.sflag [#allocation3], 1
    %11 = vsyncpa %s10, 0
    %12 = vsyncpa [#allocation6], 0
    %13 = vsyncpa [#allocation4], 0
    %s14 = scalar_lea.sflag [#allocation4], 1
    %15 = vsyncpa %s14, 0
    loop: start=0, step=1, limit=4
    $region2: #{tpu_custom_call.1} parent=1 // loop_pre_header
      _
    $region3: #{tpu_custom_call.1} parent=1 // loop_header
      %s17 = sphi 0, %s21
      %p18 = scmp.ge.s32.totalorder %s17, 4
      %s27 = sphi 0, %s29
      %s30 = sphi 0, %s27
      %s31 = sphi 0, %s30
      %s47 = sphi 0, %s31
      %s51 = sphi 0, %s51
      %s53 = sphi 0, %s51
      %s54 = sphi 0, %s53
      %s68 = sphi 0, %s54
      %s72 = sphi 0, %s72
      %s74 = sphi 0, %s72
      %s75 = sphi 0, %s74
      %s89 = sphi 0, %s75
      %s93 = sphi 0, %s93
      %s95 = sphi 0, %s93
      %s96 = sphi 0, %s95
      %s110 = sphi 0, %s96
      %s116 = sphi 0, %s118
      %s119 = sphi 0, %s116
      %s120 = sphi 0, %s119
      %s136 = sphi 0, %s120
    $region4: #{tpu_custom_call.1} parent=1 // loop_header_branch
      %20 = sbr.rel (%p18) target = $region8
    $region5: #{tpu_custom_call.1} parent=1 // loop_body
      %s22 = ssub.s32 %s17, 1
      %s23 = ssub.s32 %s17, 2
      %s24 = sadd.s32 %s17, 1
      %s25 = ssub.s32 %s17, %s24
      %p26 = scmp.eq.s32.totalorder %s25, 0
      %s28 = sadd.s32 %s27, 1
      %s29 = scalar_select %p26, %s27, %s28
      %p32 = pneg %p26
      %p33 = scmp.eq.s32.totalorder %s17, 1
      %p34 = por %p32, %p33
      %p35 = scmp.ne.s32.totalorder %s27, %s30
      %p36 = scmp.eq.s32.totalorder %s17, 0
      %p37 = por %p35, %p36
      %p38 = scmp.ne.s32.totalorder %s27, %s30
      %p39 = scmp.eq.s32.totalorder %s22, 1
      %p40 = por %p38, %p39
      %p41 = scmp.ne.s32.totalorder %s30, %s31
      %p42 = scmp.eq.s32.totalorder %s22, 0
      %p43 = por %p41, %p42
      %p44 = scmp.ne.s32.totalorder %s30, %s31
      %p45 = scmp.eq.s32.totalorder %s23, 1
      %p46 = por %p44, %p45
      %p48 = scmp.ne.s32.totalorder %s31, %s47
      %p49 = scmp.eq.s32.totalorder %s23, 0
      %p50 = por %p48, %p49
      %s52 = sadd.s32 %s51, 1
      %p55 = scmp.eq.s32.totalorder %s17, 1
      %p56 = scmp.ne.s32.totalorder %s51, %s53
      %p57 = scmp.eq.s32.totalorder %s17, 0
      %p58 = por %p56, %p57
      %p59 = scmp.ne.s32.totalorder %s51, %s53
      %p60 = scmp.eq.s32.totalorder %s22, 1
      %p61 = por %p59, %p60
      %p62 = scmp.ne.s32.totalorder %s53, %s54
      %p63 = scmp.eq.s32.totalorder %s22, 0
      %p64 = por %p62, %p63
      %p65 = scmp.ne.s32.totalorder %s53, %s54
      %p66 = scmp.eq.s32.totalorder %s23, 1
      %p67 = por %p65, %p66
      %p69 = scmp.ne.s32.totalorder %s54, %s68
      %p70 = scmp.eq.s32.totalorder %s23, 0
      %p71 = por %p69, %p70
      %s73 = sadd.s32 %s72, 1
      %p76 = scmp.eq.s32.totalorder %s17, 1
      %p77 = scmp.ne.s32.totalorder %s72, %s74
      %p78 = scmp.eq.s32.totalorder %s17, 0
      %p79 = por %p77, %p78
      %p80 = scmp.ne.s32.totalorder %s72, %s74
      %p81 = scmp.eq.s32.totalorder %s22, 1
      %p82 = por %p80, %p81
      %p83 = scmp.ne.s32.totalorder %s74, %s75
      %p84 = scmp.eq.s32.totalorder %s22, 0
      %p85 = por %p83, %p84
      %p86 = scmp.ne.s32.totalorder %s74, %s75
      %p87 = scmp.eq.s32.totalorder %s23, 1
      %p88 = por %p86, %p87
      %p90 = scmp.ne.s32.totalorder %s75, %s89
      %p91 = scmp.eq.s32.totalorder %s23, 0
      %p92 = por %p90, %p91
      %s94 = sadd.s32 %s93, 1
      %p97 = scmp.eq.s32.totalorder %s17, 1
      %p98 = scmp.ne.s32.totalorder %s93, %s95
      %p99 = scmp.eq.s32.totalorder %s17, 0
      %p100 = por %p98, %p99
      %p101 = scmp.ne.s32.totalorder %s93, %s95
      %p102 = scmp.eq.s32.totalorder %s22, 1
      %p103 = por %p101, %p102
      %p104 = scmp.ne.s32.totalorder %s95, %s96
      %p105 = scmp.eq.s32.totalorder %s22, 0
      %p106 = por %p104, %p105
      %p107 = scmp.ne.s32.totalorder %s95, %s96
      %p108 = scmp.eq.s32.totalorder %s23, 1
      %p109 = por %p107, %p108
      %p111 = scmp.ne.s32.totalorder %s96, %s110
      %p112 = scmp.eq.s32.totalorder %s23, 0
      %p113 = por %p111, %p112
      %s114 = ssub.s32 %s17, %s24
      %p115 = scmp.eq.s32.totalorder %s114, 0
      %s117 = sadd.s32 %s116, 1
      %s118 = scalar_select %p115, %s116, %s117
      %p121 = pneg %p115
      %p122 = scmp.eq.s32.totalorder %s17, 1
      %p123 = por %p121, %p122
      %p124 = scmp.ne.s32.totalorder %s116, %s119
      %p125 = scmp.eq.s32.totalorder %s17, 0
      %p126 = por %p124, %p125
      %p127 = scmp.ne.s32.totalorder %s116, %s119
      %p128 = scmp.eq.s32.totalorder %s22, 1
      %p129 = por %p127, %p128
      %p130 = scmp.ne.s32.totalorder %s119, %s120
      %p131 = scmp.eq.s32.totalorder %s22, 0
      %p132 = por %p130, %p131
      %p133 = scmp.ne.s32.totalorder %s119, %s120
      %p134 = scmp.eq.s32.totalorder %s23, 1
      %p135 = por %p133, %p134
      %p137 = scmp.ne.s32.totalorder %s120, %s136
      %p138 = scmp.eq.s32.totalorder %s23, 0
      %p139 = por %p137, %p138
      %p140 = scmp.le.s32.totalorder 1, %s17
      %p141 = scmp.lt.s32.totalorder %s17, 3
      %p142 = pnand %p140, %p141
      %p143 = pneg %p142
      // Predicated region
      $region9: #{tpu_custom_call.1} parent=5 // pred_check
        _
      $region10: #{tpu_custom_call.1} parent=5 // pred_check_branch
        %145 = sbr.rel (%p142) target = $region12
      $region11: #{tpu_custom_call.1} parent=5 // pred_region
        %s146 = ssub.s32 %s17, 1
        // Predicated region
        $region13: #{tpu_custom_call.1} parent=11 // pred_check
          %p147 = pneg %p64
        $region14: #{tpu_custom_call.1} parent=11 // pred_check_branch
          %149 = sbr.rel (%p147) target = $region16
        $region15: #{tpu_custom_call.1} parent=11 // pred_region
          _
        $region16: #{tpu_custom_call.1} parent=11 // pred_fallthru
          _
        // Predicated region
        $region17: #{tpu_custom_call.1} parent=11 // pred_check
          %p150 = pneg %p85
        $region18: #{tpu_custom_call.1} parent=11 // pred_check_branch
          %152 = sbr.rel (%p150) target = $region20
        $region19: #{tpu_custom_call.1} parent=11 // pred_region
          %s154 = ssub.s32 256, 256
          %155 = vsyncadd [#allocation6], %s154
          %s156 = sshll.u32 [#allocation5], 4
          %s157 = int_to_ptr.vmem [resolvable:$true] %s156
          %162 = dma.hbm_to_vmem [thread:$0]  %s2, 256, %s157, [#allocation6], 128, 128, 8
        $region20: #{tpu_custom_call.1} parent=11 // pred_fallthru
          _
        // Predicated region
        $region21: #{tpu_custom_call.1} parent=11 // pred_check
          %p163 = pneg %p106
        $region22: #{tpu_custom_call.1} parent=11 // pred_check_branch
          %165 = sbr.rel (%p163) target = $region24
        $region23: #{tpu_custom_call.1} parent=11 // pred_region
          _
        $region24: #{tpu_custom_call.1} parent=11 // pred_fallthru
          _
      $region12: #{tpu_custom_call.1} parent=5 // pred_fallthru
        _
      %p166 = scmp.lt.s32.totalorder %s17, 2
      // Predicated region
      $region25: #{tpu_custom_call.1} parent=5 // pred_check
        %p167 = pneg %p166
      $region26: #{tpu_custom_call.1} parent=5 // pred_check_branch
        %169 = sbr.rel (%p167) target = $region28
      $region27: #{tpu_custom_call.1} parent=5 // pred_region
        // Predicated region
        $region29: #{tpu_custom_call.1} parent=27 // pred_check
          %p170 = pneg %p37
        $region30: #{tpu_custom_call.1} parent=27 // pred_check_branch
          %172 = sbr.rel (%p170) target = $region32
        $region31: #{tpu_custom_call.1} parent=27 // pred_region
          %s173 = sand.u32 %s27, 1
          %s174 = scalar_lea.sflag [#allocation3], %s173
          %s175 = sand.u32 %s27, 1
          %s176 = smul.addr %s175, 64
          %s177 = scalar_lea.vmem [#allocation2], %s176
          %s178 = smul.u32 2, %s17
          %s180 = ssub.s32 1024, 1024
          %181 = vsyncadd %s174, %s180
          %s182 = smul.addr %s178, 128
          %s183 = scalar_lea.hbm %s0, %s182
          %s184 = sshll.u32 %s177, 4
          %s185 = int_to_ptr.vmem [resolvable:$true] %s184
          %190 = dma.hbm_to_vmem [thread:$0]  %s183, 1024, %s185, %s174, 512, 256, 16
        $region32: #{tpu_custom_call.1} parent=27 // pred_fallthru
          _
      $region28: #{tpu_custom_call.1} parent=5 // pred_fallthru
        _
      %p191 = scmp.le.s32.totalorder 1, %s17
      %p192 = scmp.lt.s32.totalorder %s17, 3
      %p193 = pnand %p191, %p192
      %p194 = pneg %p193
      // Predicated region
      $region33: #{tpu_custom_call.1} parent=5 // pred_check
        _
      $region34: #{tpu_custom_call.1} parent=5 // pred_check_branch
        %196 = sbr.rel (%p193) target = $region36
      $region35: #{tpu_custom_call.1} parent=5 // pred_region
        %s197 = ssub.s32 %s17, 1
        %s198 = sand.u32 %s30, 1
        %s199 = scalar_lea.sflag [#allocation3], %s198
        %s200 = sand.u32 %s30, 1
        %s201 = smul.addr %s200, 64
        %s202 = scalar_lea.vmem [#allocation2], %s201
        // Predicated region
        $region37: #{tpu_custom_call.1} parent=35 // pred_check
          %p203 = pneg %p43
        $region38: #{tpu_custom_call.1} parent=35 // pred_check_branch
          %205 = sbr.rel (%p203) target = $region40
        $region39: #{tpu_custom_call.1} parent=35 // pred_region
          %206 = dma.done %s199, 1024
        $region40: #{tpu_custom_call.1} parent=35 // pred_fallthru
          _
        // Predicated region
        $region41: #{tpu_custom_call.1} parent=35 // pred_check
          %p207 = pneg %p85
        $region42: #{tpu_custom_call.1} parent=35 // pred_check_branch
          %209 = sbr.rel (%p207) target = $region44
        $region43: #{tpu_custom_call.1} parent=35 // pred_region
          %210 = dma.done [#allocation6], 256
        $region44: #{tpu_custom_call.1} parent=35 // pred_fallthru
          _
        %s211 = sand.u32 %s30, 1
        %s212 = scalar_lea.sflag [#allocation3], %s211
        %s213 = sand.u32 %s30, 1
        %s214 = smul.addr %s213, 64
        %s215 = scalar_lea.vmem [#allocation2], %s214
        %p216 = pneg %p43
        %p217 = pneg %p40
        %p218 = pneg %p64
        %p219 = pneg %p61
        %p220 = pneg %p85
        %p221 = pneg %p82
        %p222 = pneg %p106
        %p223 = pneg %p103
        %p224 = pneg %p132
        %p225 = pneg %p129
        %s226 = sand.u32 %s119, 1
        %s227 = scalar_lea.sflag [#allocation4], %s226
        %s228 = sand.u32 %s119, 1
        %s229 = smul.addr %s228, 32
        %s230 = scalar_lea.vmem [#allocation7], %s229
        %s231 = smul.u32 2, %s22
        %s232 = smul.u32 2, %s22
        %v233 = vld [vmem:[%s202] sm:$0xff]
        %v234 = vld [vmem:[%s202 + $0x8] sm:$0xff]
        %v235 = vld [vmem:[%s202 + $0x10] sm:$0xff]
        %v236 = vld [vmem:[%s202 + $0x18] sm:$0xff]
        %v237 = vld [vmem:[%s202 + $0x20] sm:$0xff]
        %v238 = vld [vmem:[%s202 + $0x28] sm:$0xff]
        %v239 = vld [vmem:[%s202 + $0x30] sm:$0xff]
        %v240 = vld [vmem:[%s202 + $0x38] sm:$0xff]
        %v241 = vld [vmem:[%s1] sm:$0xff]
        %v242 = vld [vmem:[%s1 + $0x8] sm:$0xff]
        %v243 = vld [vmem:[%s3] sm:$0xff]
        %v244 = vld [vmem:[%s3 + $0x8] sm:$0xff]
        %246 = vset.pattern.permute.xlu0 0
        %247 = vperm.xlu0 %246, %v243
        %v248 = vpop.permute.xlu0 %247
        %251 = vset.pattern.permute.xlu0 0
        %252 = vperm.xlu0 %251, %v244
        %v253 = vpop.permute.xlu0 %252
        %vm255 = vcmask 261120
        %v257 = vsel %vm255, %v241, 0
        %v260 = vsel %vm255, %v242, 0
        %262 = vmatprep.subr.mxu0 0.0
        %263 = vmatpush1.msra.mxu0 0.0
        %264 = vmatprep.subr.mxu0 0.0
        %265 = vmatpush1.msra.mxu0 0.0
        %266 = vmatprep.subr.mxu0 0.0
        %267 = vmatpush1.msra.mxu0 0.0
        %268 = vmatprep.subr.mxu0 0.0
        %269 = vmatpush1.msra.mxu0 0.0
        %270 = vmatprep.subr.mxu0 0.0
        %271 = vmatpush1.msra.mxu0 0.0
        %272 = vmatprep.subr.mxu0 0.0
        %273 = vmatpush1.msra.mxu0 0.0
        %274 = vmatprep.subr.mxu0 0.0
        %275 = vmatpush1.msra.mxu0 0.0
        %276 = vmatprep.subr.mxu0 0.0
        %277 = vmatpush1.msra.mxu0 0.0
        %278 = vmatprep.subr.mxu0 0.0
        %279 = vmatpush1.msra.mxu0 0.0
        %280 = vmatprep.subr.mxu0 0.0
        %281 = vmatpush1.msra.mxu0 0.0
        %282 = vmatprep.subr.mxu0 0.0
        %283 = vmatpush1.msra.mxu0 0.0
        %284 = vmatprep.subr.mxu0 0.0
        %285 = vmatpush1.msra.mxu0 0.0
        %286 = vmatprep.subr.mxu0 %v240
        %287 = vmatpush1.msra.mxu0 %v239
        %288 = vmatprep.subr.mxu0 %v238
        %289 = vmatpush1.msra.mxu0 %v237
        %290 = vmatprep.subr.mxu0 %v236
        %291 = vmatpush1.msra.mxu0 %v235
        %292 = vmatprep.subr.mxu0 %v234
        %293 = vmatpush1.msra.mxu0 %v233
        %294 = vmatprep.subr.mxu0 0.0
        %295 = vmatpush2.msra.mxu0 0.0
        %296 = vmatprep.subr.mxu0 0.0
        %297 = vmatpush2.msra.mxu0 0.0
        %298 = vmatprep.subr.mxu0 0.0
        %299 = vmatpush2.msra.mxu0 0.0
        %300 = vmatprep.subr.mxu0 0.0
        %301 = vmatpush2.msra.mxu0 0.0
        %302 = vmatprep.subr.mxu0 0.0
        %303 = vmatpush2.msra.mxu0 0.0
        %304 = vmatprep.subr.mxu0 0.0
        %305 = vmatpush2.msra.mxu0 0.0
        %306 = vmatprep.subr.mxu0 0.0
        %307 = vmatpush2.msra.mxu0 0.0
        %308 = vmatprep.subr.mxu0 0.0
        %309 = vmatpush2.msra.mxu0 0.0
        %310 = vmatprep.subr.mxu0 0.0
        %311 = vmatpush2.msra.mxu0 0.0
        %312 = vmatprep.subr.mxu0 0.0
        %313 = vmatpush2.msra.mxu0 0.0
        %314 = vmatprep.subr.mxu0 0.0
        %315 = vmatpush2.msra.mxu0 0.0
        %316 = vmatprep.subr.mxu0 0.0
        %317 = vmatpush2.msra.mxu0 0.0
        %318 = vmatprep.subr.mxu0 0.0
        %319 = vmatpush2.msra.mxu0 0.0
        %320 = vmatprep.subr.mxu0 0.0
        %321 = vmatpush2.msra.mxu0 0.0
        %322 = vmatprep.subr.mxu0 0.0
        %323 = vmatpush2.msra.mxu0 0.0
        %324 = vmatprep.subr.mxu0 0.0
        %325 = vmatpush2.msra.mxu0 0.0
        %326 = vmatprep.mubr.f32.mxu0 0.0
        %327 = vmatmul.mubr.f32.gmra.mxu0 %v257
        %v328 = vpop.f32.mrf.mxu0
        %v329 = vadd.f32 %v248, %v328
        %v330 = vpop.f32.mrf.mxu0
        %v331 = vadd.f32 %v248, %v330
        %332 = vmatprep.mubr.f32.mxu0 0.0
        %333 = vmatmul.mubr.f32.gmra.mxu0 %v260
        %v334 = vpop.f32.mrf.mxu0
        %v335 = vadd.f32 %v253, %v334
        %v336 = vpop.f32.mrf.mxu0
        %v337 = vadd.f32 %v253, %v336
        %338 = vdwg.mxu0
        %v339 = vxor.u32 %v329, 2147483648
        %v340 = vxor.u32 %v331, 2147483648
        %v341 = vxor.u32 %v335, 2147483648
        %v342 = vxor.u32 %v337, 2147483648
        %v343 = vmul.f32 %v339, 1.442695
        %v344 = vpow.pop %v343
        %v345 = vmul.f32 %v340, 1.442695
        %v346 = vpow.pop %v345
        %v347 = vmul.f32 %v341, 1.442695
        %v348 = vpow.pop %v347
        %v349 = vmul.f32 %v342, 1.442695
        %v350 = vpow.pop %v349
        %v351 = vadd.f32 %v344, 1.0
        %v352 = vadd.f32 %v346, 1.0
        %v353 = vadd.f32 %v348, 1.0
        %v354 = vadd.f32 %v350, 1.0
        %v355 = vrcp.pop %v351
        %v356 = vmul.f32 1.0, %v355
        %v357 = vrcp.pop %v352
        %v358 = vmul.f32 1.0, %v357
        %v359 = vrcp.pop %v353
        %v360 = vmul.f32 1.0, %v359
        %v361 = vrcp.pop %v354
        %v362 = vmul.f32 1.0, %v361
        %v363 = vld [vmem:[#allocation5] sm:$0xff]
        %v364 = vld [vmem:[#allocation5 + $0x8] sm:$0xff]
        %vm365 = vcmask 130048
        %v367 = vsel %vm365, %v363, 0
        %v370 = vsel %vm365, %v364, 0
        %372 = vmatprep.subr.mxu0 0.0
        %373 = vmatpush1.msra.mxu0 0.0
        %374 = vmatprep.subr.mxu0 0.0
        %375 = vmatpush1.msra.mxu0 0.0
        %376 = vmatprep.subr.mxu0 0.0
        %377 = vmatpush1.msra.mxu0 0.0
        %378 = vmatprep.subr.mxu0 0.0
        %379 = vmatpush1.msra.mxu0 0.0
        %380 = vmatprep.subr.mxu0 0.0
        %381 = vmatpush1.msra.mxu0 0.0
        %382 = vmatprep.subr.mxu0 0.0
        %383 = vmatpush1.msra.mxu0 0.0
        %384 = vmatprep.subr.mxu0 0.0
        %385 = vmatpush1.msra.mxu0 0.0
        %386 = vmatprep.subr.mxu0 0.0
        %387 = vmatpush1.msra.mxu0 0.0
        %388 = vmatprep.subr.mxu0 0.0
        %389 = vmatpush1.msra.mxu0 0.0
        %390 = vmatprep.subr.mxu0 0.0
        %391 = vmatpush1.msra.mxu0 0.0
        %392 = vmatprep.subr.mxu0 0.0
        %393 = vmatpush1.msra.mxu0 0.0
        %394 = vmatprep.subr.mxu0 0.0
        %395 = vmatpush1.msra.mxu0 0.0
        %396 = vmatprep.subr.mxu0 0.0
        %397 = vmatpush1.msra.mxu0 0.0
        %398 = vmatprep.subr.mxu0 0.0
        %399 = vmatpush1.msra.mxu0 0.0
        %400 = vmatprep.subr.mxu0 %v362
        %401 = vmatpush1.msra.mxu0 %v360
        %402 = vmatprep.subr.mxu0 %v358
        %403 = vmatpush1.msra.mxu0 %v356
        %404 = vmatprep.subr.mxu0 0.0
        %405 = vmatpush2.msra.mxu0 0.0
        %406 = vmatprep.subr.mxu0 0.0
        %407 = vmatpush2.msra.mxu0 0.0
        %408 = vmatprep.subr.mxu0 0.0
        %409 = vmatpush2.msra.mxu0 0.0
        %410 = vmatprep.subr.mxu0 0.0
        %411 = vmatpush2.msra.mxu0 0.0
        %412 = vmatprep.subr.mxu0 0.0
        %413 = vmatpush2.msra.mxu0 0.0
        %414 = vmatprep.subr.mxu0 0.0
        %415 = vmatpush2.msra.mxu0 0.0
        %416 = vmatprep.subr.mxu0 0.0
        %417 = vmatpush2.msra.mxu0 0.0
        %418 = vmatprep.subr.mxu0 0.0
        %419 = vmatpush2.msra.mxu0 0.0
        %420 = vmatprep.subr.mxu0 0.0
        %421 = vmatpush2.msra.mxu0 0.0
        %422 = vmatprep.subr.mxu0 0.0
        %423 = vmatpush2.msra.mxu0 0.0
        %424 = vmatprep.subr.mxu0 0.0
        %425 = vmatpush2.msra.mxu0 0.0
        %426 = vmatprep.subr.mxu0 0.0
        %427 = vmatpush2.msra.mxu0 0.0
        %428 = vmatprep.subr.mxu0 0.0
        %429 = vmatpush2.msra.mxu0 0.0
        %430 = vmatprep.subr.mxu0 0.0
        %431 = vmatpush2.msra.mxu0 0.0
        %432 = vmatprep.subr.mxu0 0.0
        %433 = vmatpush2.msra.mxu0 0.0
        %434 = vmatprep.subr.mxu0 0.0
        %435 = vmatpush2.msra.mxu0 0.0
        %436 = vmatprep.mubr.f32.mxu0 0.0
        %437 = vmatmul.mubr.f32.gmra.mxu0 %v367
        %v438 = vpop.f32.mrf.mxu0
        %v439 = vadd.f32 0.0, %v438
        %v440 = vpop.f32.mrf.mxu0
        %v441 = vadd.f32 0.0, %v440
        %442 = vmatprep.mubr.f32.mxu0 0.0
        %443 = vmatmul.mubr.f32.gmra.mxu0 %v370
        %v444 = vpop.f32.mrf.mxu0
        %v445 = vadd.f32 0.0, %v444
        %v446 = vpop.f32.mrf.mxu0
        %v447 = vadd.f32 0.0, %v446
        %448 = vdwg.mxu0
        %449 = vst [vmem:[%s230] sm:$0xff] %v439
        %450 = vst [vmem:[%s230 + $0x8] sm:$0xff] %v441
        %451 = vst [vmem:[%s230 + $0x10] sm:$0xff] %v445
        %452 = vst [vmem:[%s230 + $0x18] sm:$0xff] %v447
        %s453 = sand.u32 %s119, 1
        %s454 = scalar_lea.sflag [#allocation4], %s453
        %s455 = sand.u32 %s119, 1
        %s456 = smul.addr %s455, 32
        %s457 = scalar_lea.vmem [#allocation7], %s456
        // Predicated region
        $region45: #{tpu_custom_call.1} parent=35 // pred_check
          %p458 = pneg %p129
        $region46: #{tpu_custom_call.1} parent=35 // pred_check_branch
          %460 = sbr.rel (%p458) target = $region48
        $region47: #{tpu_custom_call.1} parent=35 // pred_region
          %s461 = smul.u32 2, %s22
          %s463 = ssub.s32 512, 512
          %464 = vsyncadd %s454, %s463
          %s465 = smul.addr %s461, 128
          %s466 = scalar_lea.hbm %s4, %s465
          %s467 = sshll.u32 %s457, 4
          %s468 = int_to_ptr.vmem [resolvable:$true] %s467
          %473 = dma.vmem_to_hbm [thread:$0]  %s468, 512, %s466, %s454, 256, 512, 16
        $region48: #{tpu_custom_call.1} parent=35 // pred_fallthru
          _
      $region36: #{tpu_custom_call.1} parent=5 // pred_fallthru
        _
      %p474 = scmp.le.s32.totalorder 2, %s17
      // Predicated region
      $region49: #{tpu_custom_call.1} parent=5 // pred_check
        %p475 = pneg %p474
      $region50: #{tpu_custom_call.1} parent=5 // pred_check_branch
        %477 = sbr.rel (%p475) target = $region52
      $region51: #{tpu_custom_call.1} parent=5 // pred_region
        %s478 = ssub.s32 %s17, 2
        // Predicated region
        $region53: #{tpu_custom_call.1} parent=51 // pred_check
          %p479 = pneg %p135
        $region54: #{tpu_custom_call.1} parent=51 // pred_check_branch
          %481 = sbr.rel (%p479) target = $region56
        $region55: #{tpu_custom_call.1} parent=51 // pred_region
          %s482 = sand.u32 %s120, 1
          %s483 = scalar_lea.sflag [#allocation4], %s482
          %s484 = sand.u32 %s120, 1
          %s485 = smul.addr %s484, 32
          %s486 = scalar_lea.vmem [#allocation7], %s485
          %487 = dma.done %s483, 512
        $region56: #{tpu_custom_call.1} parent=51 // pred_fallthru
          _
      $region52: #{tpu_custom_call.1} parent=5 // pred_fallthru
        _
    $region6: #{tpu_custom_call.1} parent=1 // loop_footer
      %s21 = sadd.s32 1, %s17
    $region7: #{tpu_custom_call.1} parent=1 // loop_footer_branch
      %16 = sbr.rel target = $region3
    $region8: #{tpu_custom_call.1} parent=1 // loop_exit
      _
    %488 = vsyncpa [#allocation3], 1
    %s489 = scalar_lea.sflag [#allocation3], 1
    %490 = vsyncpa %s489, 1
    %491 = vsyncpa [#allocation6], 1
    %492 = vsyncpa [#allocation4], 1
    %s493 = scalar_lea.sflag [#allocation4], 1
    %494 = vsyncpa %s493, 1

</llo_original>
